<compile_context>
chip_gen: v7x
topology: tpu7x:2x2x1
jax: 0.10.0
libtpu: 0.0.40
codegen_flags: <defaults>
</compile_context>

<pallas_src>
import math
from functools import partial

import jax
import jax.numpy as jnp
from jax.experimental import pallas as pl
from jax.experimental.pallas import tpu as pltpu


def _round_up(n, m):
    return (n + m - 1) // m * m


# ---------------------------------------------------------------------------
# Kernel: one (bm, d_model) row tile; reduction over d_ff tiles (grid axis 1)
#   acc += relu(x @ W1[:, ff_blk] + b1[ff_blk]) @ W2[ff_blk, :]
#   last ff step:  o = acc + b2
# ---------------------------------------------------------------------------
def _ffn_kernel(x_ref, w1_ref, b1_ref, w2_ref, b2_ref, o_ref, acc_ref):
    ff = pl.program_id(1)

    @pl.when(ff == 0)
    def _():
        acc_ref[...] = jnp.zeros_like(acc_ref)

    # f32 -> bf16 cast fused into the kernel (VPU work hidden under the MXU).
    x = x_ref[...].astype(jnp.bfloat16)

    # linear_1 (bf16 MXU matmul, f32 accumulation) + bias + relu
    h = jnp.dot(x, w1_ref[...], preferred_element_type=jnp.float32)
    h = jnp.maximum(h + b1_ref[...], 0.0)

    # dropout: identity in eval mode
    # TODO(synk): train-mode dropout would use pltpu.prng_seed/prng_random_bits.

    # linear_2 partial product, accumulated across d_ff tiles
    acc_ref[...] += jnp.dot(h.astype(w2_ref.dtype), w2_ref[...],
                            preferred_element_type=jnp.float32)

    @pl.when(ff == pl.num_programs(1) - 1)
    def _():
        o_ref[...] = (acc_ref[...] + b2_ref[...]).astype(o_ref.dtype)


# ---------------------------------------------------------------------------
# Generation-aware sizing helpers
# ---------------------------------------------------------------------------
def _tpu_vmem_and_cores():
    vmem_cap = 128 * 1024 * 1024
    try:
        info = pltpu.get_tpu_info()
        vmem_cap = int(getattr(info, "vmem_capacity_bytes", vmem_cap))
    except Exception:
        pass
    kind = ""
    try:
        kind = str(jax.devices()[0].device_kind).lower()
    except Exception:
        pass
    num_tc = 2 if "v7" in kind else 1   # v7x has two TensorCores per chip
    return vmem_cap, num_tc


def _choose_tff(d_model, d_ff, budget):
    """Full-width d_ff if the (single-buffered) weights fit ~half the budget,
    otherwise the largest lane-aligned divisor whose blocks fit."""
    if d_ff % 128 != 0:
        return d_ff                      # must cover the full (untileable) dim
    full = 2 * d_model * d_ff * 2 + (d_ff + d_model) * 4
    if full <= budget // 2:
        return d_ff
    tff = 128
    for cand in range(d_ff - 128, 0, -128):
        if d_ff % cand:
            continue
        blk = 2 * (2 * d_model * cand * 2 + cand * 4)   # double-buffered blocks
        if blk <= budget // 2:
            tff = cand
            break
    return tff


def _choose_bm(rows8, d_model, tff, single_buffer_w, budget, target_bm):
    w_bufs = 1 if single_buffer_w else 2
    w_bytes = w_bufs * (2 * d_model * tff * 2 + tff * 4) + d_model * 4
    per_row = (2 * d_model * 4      # x tiles (f32, double-buffered)
               + 2 * d_model * 4    # out tiles (f32, double-buffered)
               + tff * 4            # (bm, tff) intermediate
               + d_model * 4)       # accumulator scratch
    bm_cap = max(8, (budget - w_bytes) // per_row)
    bm = min(target_bm, bm_cap, rows8)
    if bm >= 256:                    # fill the 256-wide MXU M dim on v6e/v7x
        bm = bm // 256 * 256
    return max(8, bm // 8 * 8)


# ---------------------------------------------------------------------------
# Wrapper
# ---------------------------------------------------------------------------
def feed_forward(x, w1, b1, w2, b2, *, block_m=1024, out_dtype=None,
                 single_buffer_weights=True):
    """x: (..., d_model); w1: (d_model, d_ff); b1: (d_ff,);
    w2: (d_ff, d_model); b2: (d_model,)."""
    orig_shape = x.shape
    d_model = orig_shape[-1]
    d_ff = w1.shape[1]
    rows = math.prod(orig_shape[:-1])
    out_dtype = x.dtype if out_dtype is None else out_dtype
    out_isize = jnp.dtype(out_dtype).itemsize

    vmem_cap, num_tc = _tpu_vmem_and_cores()
    budget = min(int(0.85 * vmem_cap), 112 * 1024 * 1024)

    tff = _choose_tff(d_model, d_ff, budget)
    grid_ff = d_ff // tff
    weights_const = single_buffer_weights and grid_ff == 1

    rows8 = _round_up(rows, 8)
    bm = _choose_bm(rows8, d_model, tff, weights_const, budget, block_m)
    rows_p = _round_up(rows8, bm)          # bm always divides rows_p

    # Megacore split only on 2-TC chips and only if each half still fills MXU.
    if num_tc >= 2 and rows_p // bm < 2 and bm >= 512:
        bm = _round_up(-(-rows_p // 2), 256)
        rows_p = _round_up(rows8, bm)
    grid_m = rows_p // bm

    x2 = x.reshape(rows, d_model)
    if rows_p != rows:
        x2 = jnp.pad(x2, ((0, rows_p - rows), (0, 0)))

    w1 = w1.astype(jnp.bfloat16)
    w2 = w2.astype(jnp.bfloat16)
    b1_2d = b1.reshape(1, d_ff).astype(jnp.float32)
    b2_2d = b2.reshape(1, d_model).astype(jnp.float32)

    w_mode = pl.Buffered(1) if weights_const else None
    const_mode = pl.Buffered(1) if single_buffer_weights else None

    vmem_est = ((1 if weights_const else 2) * (2 * d_model * tff * 2 + tff * 4)
                + d_model * 4
                + 2 * bm * d_model * 4
                + 2 * bm * d_model * out_isize
                + bm * tff * 4
                + bm * d_model * 4)
    vmem_limit = int(min(max(int(1.25 * vmem_est), 32 * 1024 * 1024), budget))

    cost = pl.CostEstimate(
        flops=4 * rows_p * d_model * d_ff,
        transcendentals=0,
        bytes_accessed=(rows_p * d_model * 4
                        + 2 * d_model * d_ff * 2
                        + (d_ff + d_model) * 4
                        + rows_p * d_model * out_isize))

    out = pl.pallas_call(
        _ffn_kernel,
        grid=(grid_m, grid_ff),
        in_specs=[
            pl.BlockSpec((bm, d_model), lambda i, f: (i, 0)),
            pl.BlockSpec((d_model, tff), lambda i, f: (0, f),
                         pipeline_mode=w_mode),
            pl.BlockSpec((1, tff), lambda i, f: (0, f),
                         pipeline_mode=w_mode),
            pl.BlockSpec((tff, d_model), lambda i, f: (f, 0),
                         pipeline_mode=w_mode),
            pl.BlockSpec((1, d_model), lambda i, f: (0, 0),
                         pipeline_mode=const_mode),
        ],
        out_specs=pl.BlockSpec((bm, d_model), lambda i, f: (i, 0)),
        out_shape=jax.ShapeDtypeStruct((rows_p, d_model), out_dtype),
        scratch_shapes=[pltpu.VMEM((bm, d_model), jnp.float32)],
        compiler_params=pltpu.CompilerParams(
            dimension_semantics=("parallel", "arbitrary"),
            vmem_limit_bytes=vmem_limit,
        ),
        cost_estimate=cost,
    )(x2, w1, b1_2d, w2, b2_2d)

    return out[:rows].reshape(orig_shape[:-1] + (d_model,))


# ---------------------------------------------------------------------------
# Deterministic parameter init (shapes follow the torch module __init__)
# ---------------------------------------------------------------------------
def init_params(key, d_model, d_ff):
    k1, k2, k3, k4 = jax.random.split(key, 4)
    # weights stored [in, out] (pre-transposed) and in bf16 for the MXU
    w1 = (0.02 * jax.random.normal(k1, (d_model, d_ff))).astype(jnp.bfloat16)
    b1 = (0.02 * jax.random.normal(k2, (d_ff,))).astype(jnp.float32)
    w2 = (0.02 * jax.random.normal(k3, (d_ff, d_model))).astype(jnp.bfloat16)
    b2 = (0.02 * jax.random.normal(k4, (d_model,))).astype(jnp.float32)
    return {"w1": w1, "b1": b1, "w2": w2, "b2": b2}


def _reference(x, p):
    # Pure-JAX reference matching the kernel's bf16-input / f32-accumulate math
    xb = x.astype(jnp.bfloat16).astype(jnp.float32)
    h = jnp.maximum(xb @ p["w1"].astype(jnp.float32) + p["b1"], 0.0)
    hb = h.astype(jnp.bfloat16).astype(jnp.float32)
    return hb @ p["w2"].astype(jnp.float32) + p["b2"]


if __name__ == "__main__":
    B, S = 2, 8
    D_MODEL, D_FF = 128, 256   # lane-aligned (multiples of 128)

    key = jax.random.PRNGKey(0)
    k_x, k_p = jax.random.split(key)

    x = jax.random.normal(k_x, (B, S, D_MODEL), jnp.float32)
    params = init_params(k_p, D_MODEL, D_FF)

    def run(single_buffer):
        fn = jax.jit(partial(feed_forward,
                             w1=params["w1"], b1=params["b1"],
                             w2=params["w2"], b2=params["b2"],
                             single_buffer_weights=single_buffer))
        return jax.block_until_ready(fn(x))

    try:
        out = run(True)
    except Exception:
        # Fallback if this JAX build rejects pl.Buffered(1) on BlockSpecs.
        out = run(False)

    assert out.shape == (B, S, D_MODEL)
    assert bool(jnp.all(jnp.isfinite(out)))

    ref = _reference(x, params)
    assert bool(jnp.allclose(out, ref, atol=2e-2, rtol=2e-2)), (
        float(jnp.max(jnp.abs(out - ref))))

    print("KERNEL_OK")
</pallas_src>

<mosaic_0001>
module attributes {stable_mosaic.version = 11 : i64} {
  func.func @_ffn_kernel(%arg0: i32, %arg1: i32, %arg2: memref<16x128xf32, #tpu.memory_space<vmem>>, %arg3: memref<128x256xbf16, #tpu.memory_space<vmem>>, %arg4: memref<1x256xf32, #tpu.memory_space<vmem>>, %arg5: memref<256x128xbf16, #tpu.memory_space<vmem>>, %arg6: memref<1x128xf32, #tpu.memory_space<vmem>>, %arg7: memref<16x128xf32, #tpu.memory_space<vmem>>, %arg8: memref<16x128xf32, #tpu.memory_space<vmem>>) attributes {dimension_semantics = [#tpu.dimension_semantics<parallel>, #tpu.dimension_semantics<arbitrary>], iteration_bounds = array<i64: 1, 1>, scalar_prefetch = 0 : i64, scratch_operands = 1 : i64, tpu.core_type = #tpu.core_type<tc>, window_params = [{transform_indices = @transform_0, window_bounds = array<i64: 16, 128>}, {pipeline_mode = #tpu.pipeline_mode<synchronous>, transform_indices = @transform_1, window_bounds = array<i64: 128, 256>}, {pipeline_mode = #tpu.pipeline_mode<synchronous>, transform_indices = @transform_2, window_bounds = array<i64: 1, 256>}, {pipeline_mode = #tpu.pipeline_mode<synchronous>, transform_indices = @transform_3, window_bounds = array<i64: 256, 128>}, {pipeline_mode = #tpu.pipeline_mode<synchronous>, transform_indices = @transform_4, window_bounds = array<i64: 1, 128>}, {transform_indices = @transform_5, window_bounds = array<i64: 16, 128>}]} {
    %c0_i32 = arith.constant 0 : i32
    %0 = arith.cmpi eq, %arg1, %c0_i32 : i32
    %1 = arith.extui %0 : i1 to i32
    %c0_i32_0 = arith.constant 0 : i32
    %2 = arith.cmpi ne, %1, %c0_i32_0 : i32
    scf.if %2 {
      %cst_16 = arith.constant 0.000000e+00 : f32
      %21 = vector.broadcast %cst_16 : f32 to vector<16x128xf32>
      %c0_17 = arith.constant 0 : index
      %c0_18 = arith.constant 0 : index
      %22 = vector.load %arg8[%c0_17, %c0_18] : memref<16x128xf32, #tpu.memory_space<vmem>>, vector<16x128xf32>
      tpu.vector_store %arg8[%c0_17, %c0_18], %21 {strides = array<i32>} : memref<16x128xf32, #tpu.memory_space<vmem>>, vector<16x128xf32>,
    } else {
    }
    %c0 = arith.constant 0 : index
    %c0_1 = arith.constant 0 : index
    %3 = vector.load %arg2[%c0, %c0_1] : memref<16x128xf32, #tpu.memory_space<vmem>>, vector<16x128xf32>
    %4 = arith.truncf %3 : vector<16x128xf32> to vector<16x128xbf16>
    %c0_2 = arith.constant 0 : index
    %c0_3 = arith.constant 0 : index
    %5 = vector.load %arg3[%c0_2, %c0_3] : memref<128x256xbf16, #tpu.memory_space<vmem>>, vector<128x256xbf16>
    %cst = arith.constant dense<0.000000e+00> : vector<16x256xf32>
    %6 = tpu.matmul %4, %5, %cst {dimension_numbers = #tpu.dot_dimension_numbers<[1], [0], [0], [1], [0, 0, 1, 1], [], []>} : vector<16x128xbf16>, vector<128x256xbf16>, vector<16x256xf32> -> vector<16x256xf32>
    %c0_4 = arith.constant 0 : index
    %c0_5 = arith.constant 0 : index
    %7 = vector.load %arg4[%c0_4, %c0_5] : memref<1x256xf32, #tpu.memory_space<vmem>>, vector<1x256xf32>
    %8 = vector.broadcast %7 : vector<1x256xf32> to vector<16x256xf32>
    %9 = arith.addf %6, %8 : vector<16x256xf32>
    %cst_6 = arith.constant 0.000000e+00 : f32
    %10 = vector.broadcast %cst_6 : f32 to vector<16x256xf32>
    %11 = arith.maximumf %9, %10 : vector<16x256xf32>
    %c0_7 = arith.constant 0 : index
    %c0_8 = arith.constant 0 : index
    %12 = vector.load %arg8[%c0_7, %c0_8] : memref<16x128xf32, #tpu.memory_space<vmem>>, vector<16x128xf32>
    %13 = arith.truncf %11 : vector<16x256xf32> to vector<16x256xbf16>
    %c0_9 = arith.constant 0 : index
    %c0_10 = arith.constant 0 : index
    %14 = vector.load %arg5[%c0_9, %c0_10] : memref<256x128xbf16, #tpu.memory_space<vmem>>, vector<256x128xbf16>
    %cst_11 = arith.constant dense<0.000000e+00> : vector<16x128xf32>
    %15 = tpu.matmul %13, %14, %cst_11 {dimension_numbers = #tpu.dot_dimension_numbers<[1], [0], [0], [1], [0, 0, 1, 1], [], []>} : vector<16x256xbf16>, vector<256x128xbf16>, vector<16x128xf32> -> vector<16x128xf32>
    %16 = arith.addf %12, %15 : vector<16x128xf32>
    %c0_12 = arith.constant 0 : index
    %c0_13 = arith.constant 0 : index
    %17 = vector.load %arg8[%c0_12, %c0_13] : memref<16x128xf32, #tpu.memory_space<vmem>>, vector<16x128xf32>
    tpu.vector_store %arg8[%c0_12, %c0_13], %16 {strides = array<i32>} : memref<16x128xf32, #tpu.memory_space<vmem>>, vector<16x128xf32>,
    %c0_i32_14 = arith.constant 0 : i32
    %18 = arith.cmpi eq, %arg1, %c0_i32_14 : i32
    %19 = arith.extui %18 : i1 to i32
    %c0_i32_15 = arith.constant 0 : i32
    %20 = arith.cmpi ne, %19, %c0_i32_15 : i32
    scf.if %20 {
      %c0_16 = arith.constant 0 : index
      %c0_17 = arith.constant 0 : index
      %21 = vector.load %arg8[%c0_16, %c0_17] : memref<16x128xf32, #tpu.memory_space<vmem>>, vector<16x128xf32>
      %c0_18 = arith.constant 0 : index
      %c0_19 = arith.constant 0 : index
      %22 = vector.load %arg6[%c0_18, %c0_19] : memref<1x128xf32, #tpu.memory_space<vmem>>, vector<1x128xf32>
      %23 = vector.broadcast %22 : vector<1x128xf32> to vector<16x128xf32>
      %24 = arith.addf %21, %23 : vector<16x128xf32>
      %c0_20 = arith.constant 0 : index
      %c0_21 = arith.constant 0 : index
      %25 = vector.load %arg7[%c0_20, %c0_21] : memref<16x128xf32, #tpu.memory_space<vmem>>, vector<16x128xf32>
      tpu.vector_store %arg7[%c0_20, %c0_21], %24 {strides = array<i32>} : memref<16x128xf32, #tpu.memory_space<vmem>>, vector<16x128xf32>,
    } else {
    }
    return
  }
  func.func @transform_0(%arg0: i32, %arg1: i32) -> (i32, i32) {
    %c0_i32 = arith.constant 0 : i32
    %c0_i32_0 = arith.constant 0 : i32
    return %arg0, %c0_i32 : i32, i32
  }
  func.func @transform_1(%arg0: i32, %arg1: i32) -> (i32, i32) {
    %c0_i32 = arith.constant 0 : i32
    %c0_i32_0 = arith.constant 0 : i32
    return %c0_i32, %arg1 : i32, i32
  }
  func.func @transform_2(%arg0: i32, %arg1: i32) -> (i32, i32) {
    %c0_i32 = arith.constant 0 : i32
    %c0_i32_0 = arith.constant 0 : i32
    return %c0_i32, %arg1 : i32, i32
  }
  func.func @transform_3(%arg0: i32, %arg1: i32) -> (i32, i32) {
    %c0_i32 = arith.constant 0 : i32
    %c0_i32_0 = arith.constant 0 : i32
    return %arg1, %c0_i32 : i32, i32
  }
  func.func @transform_4(%arg0: i32, %arg1: i32) -> (i32, i32) {
    %c0_i32 = arith.constant 0 : i32
    %c0_i32_0 = arith.constant 0 : i32
    %c0_i32_1 = arith.constant 0 : i32
    return %c0_i32, %c0_i32_0 : i32, i32
  }
  func.func @transform_5(%arg0: i32, %arg1: i32) -> (i32, i32) {
    %c0_i32 = arith.constant 0 : i32
    %c0_i32_0 = arith.constant 0 : i32
    return %arg0, %c0_i32 : i32, i32
  }
}

module attributes {stable_mosaic.version = 11 : i64} {
  func.func @_ffn_kernel(%arg0: i32, %arg1: i32, %arg2: memref<16x128xf32, #tpu.memory_space<vmem>>, %arg3: memref<128x256xbf16, #tpu.memory_space<vmem>>, %arg4: memref<1x256xf32, #tpu.memory_space<vmem>>, %arg5: memref<256x128xbf16, #tpu.memory_space<vmem>>, %arg6: memref<1x128xf32, #tpu.memory_space<vmem>>, %arg7: memref<16x128xf32, #tpu.memory_space<vmem>>, %arg8: memref<16x128xf32, #tpu.memory_space<vmem>>) attributes {dimension_semantics = [#tpu.dimension_semantics<parallel>, #tpu.dimension_semantics<arbitrary>], iteration_bounds = array<i64: 1, 1>, scalar_prefetch = 0 : i64, scratch_operands = 1 : i64, tpu.core_type = #tpu.core_type<tc>, window_params = [{transform_indices = @transform_0, window_bounds = array<i64: 16, 128>}, {transform_indices = @transform_1, window_bounds = array<i64: 128, 256>}, {transform_indices = @transform_2, window_bounds = array<i64: 1, 256>}, {transform_indices = @transform_3, window_bounds = array<i64: 256, 128>}, {pipeline_mode = #tpu.pipeline_mode<synchronous>, transform_indices = @transform_4, window_bounds = array<i64: 1, 128>}, {transform_indices = @transform_5, window_bounds = array<i64: 16, 128>}]} {
    %c0_i32 = arith.constant 0 : i32
    %0 = arith.cmpi eq, %arg1, %c0_i32 : i32
    %1 = arith.extui %0 : i1 to i32
    %c0_i32_0 = arith.constant 0 : i32
    %2 = arith.cmpi ne, %1, %c0_i32_0 : i32
    scf.if %2 {
      %cst_16 = arith.constant 0.000000e+00 : f32
      %21 = vector.broadcast %cst_16 : f32 to vector<16x128xf32>
      %c0_17 = arith.constant 0 : index
      %c0_18 = arith.constant 0 : index
      %22 = vector.load %arg8[%c0_17, %c0_18] : memref<16x128xf32, #tpu.memory_space<vmem>>, vector<16x128xf32>
      tpu.vector_store %arg8[%c0_17, %c0_18], %21 {strides = array<i32>} : memref<16x128xf32, #tpu.memory_space<vmem>>, vector<16x128xf32>,
    } else {
    }
    %c0 = arith.constant 0 : index
    %c0_1 = arith.constant 0 : index
    %3 = vector.load %arg2[%c0, %c0_1] : memref<16x128xf32, #tpu.memory_space<vmem>>, vector<16x128xf32>
    %4 = arith.truncf %3 : vector<16x128xf32> to vector<16x128xbf16>
    %c0_2 = arith.constant 0 : index
    %c0_3 = arith.constant 0 : index
    %5 = vector.load %arg3[%c0_2, %c0_3] : memref<128x256xbf16, #tpu.memory_space<vmem>>, vector<128x256xbf16>
    %cst = arith.constant dense<0.000000e+00> : vector<16x256xf32>
    %6 = tpu.matmul %4, %5, %cst {dimension_numbers = #tpu.dot_dimension_numbers<[1], [0], [0], [1], [0, 0, 1, 1], [], []>} : vector<16x128xbf16>, vector<128x256xbf16>, vector<16x256xf32> -> vector<16x256xf32>
    %c0_4 = arith.constant 0 : index
    %c0_5 = arith.constant 0 : index
    %7 = vector.load %arg4[%c0_4, %c0_5] : memref<1x256xf32, #tpu.memory_space<vmem>>, vector<1x256xf32>
    %8 = vector.broadcast %7 : vector<1x256xf32> to vector<16x256xf32>
    %9 = arith.addf %6, %8 : vector<16x256xf32>
    %cst_6 = arith.constant 0.000000e+00 : f32
    %10 = vector.broadcast %cst_6 : f32 to vector<16x256xf32>
    %11 = arith.maximumf %9, %10 : vector<16x256xf32>
    %c0_7 = arith.constant 0 : index
    %c0_8 = arith.constant 0 : index
    %12 = vector.load %arg8[%c0_7, %c0_8] : memref<16x128xf32, #tpu.memory_space<vmem>>, vector<16x128xf32>
    %13 = arith.truncf %11 : vector<16x256xf32> to vector<16x256xbf16>
    %c0_9 = arith.constant 0 : index
    %c0_10 = arith.constant 0 : index
    %14 = vector.load %arg5[%c0_9, %c0_10] : memref<256x128xbf16, #tpu.memory_space<vmem>>, vector<256x128xbf16>
    %cst_11 = arith.constant dense<0.000000e+00> : vector<16x128xf32>
    %15 = tpu.matmul %13, %14, %cst_11 {dimension_numbers = #tpu.dot_dimension_numbers<[1], [0], [0], [1], [0, 0, 1, 1], [], []>} : vector<16x256xbf16>, vector<256x128xbf16>, vector<16x128xf32> -> vector<16x128xf32>
    %16 = arith.addf %12, %15 : vector<16x128xf32>
    %c0_12 = arith.constant 0 : index
    %c0_13 = arith.constant 0 : index
    %17 = vector.load %arg8[%c0_12, %c0_13] : memref<16x128xf32, #tpu.memory_space<vmem>>, vector<16x128xf32>
    tpu.vector_store %arg8[%c0_12, %c0_13], %16 {strides = array<i32>} : memref<16x128xf32, #tpu.memory_space<vmem>>, vector<16x128xf32>,
    %c0_i32_14 = arith.constant 0 : i32
    %18 = arith.cmpi eq, %arg1, %c0_i32_14 : i32
    %19 = arith.extui %18 : i1 to i32
    %c0_i32_15 = arith.constant 0 : i32
    %20 = arith.cmpi ne, %19, %c0_i32_15 : i32
    scf.if %20 {
      %c0_16 = arith.constant 0 : index
      %c0_17 = arith.constant 0 : index
      %21 = vector.load %arg8[%c0_16, %c0_17] : memref<16x128xf32, #tpu.memory_space<vmem>>, vector<16x128xf32>
      %c0_18 = arith.constant 0 : index
      %c0_19 = arith.constant 0 : index
      %22 = vector.load %arg6[%c0_18, %c0_19] : memref<1x128xf32, #tpu.memory_space<vmem>>, vector<1x128xf32>
      %23 = vector.broadcast %22 : vector<1x128xf32> to vector<16x128xf32>
      %24 = arith.addf %21, %23 : vector<16x128xf32>
      %c0_20 = arith.constant 0 : index
      %c0_21 = arith.constant 0 : index
      %25 = vector.load %arg7[%c0_20, %c0_21] : memref<16x128xf32, #tpu.memory_space<vmem>>, vector<16x128xf32>
      tpu.vector_store %arg7[%c0_20, %c0_21], %24 {strides = array<i32>} : memref<16x128xf32, #tpu.memory_space<vmem>>, vector<16x128xf32>,
    } else {
    }
    return
  }
  func.func @transform_0(%arg0: i32, %arg1: i32) -> (i32, i32) {
    %c0_i32 = arith.constant 0 : i32
    %c0_i32_0 = arith.constant 0 : i32
    return %arg0, %c0_i32 : i32, i32
  }
  func.func @transform_1(%arg0: i32, %arg1: i32) -> (i32, i32) {
    %c0_i32 = arith.constant 0 : i32
    %c0_i32_0 = arith.constant 0 : i32
    return %c0_i32, %arg1 : i32, i32
  }
  func.func @transform_2(%arg0: i32, %arg1: i32) -> (i32, i32) {
    %c0_i32 = arith.constant 0 : i32
    %c0_i32_0 = arith.constant 0 : i32
    return %c0_i32, %arg1 : i32, i32
  }
  func.func @transform_3(%arg0: i32, %arg1: i32) -> (i32, i32) {
    %c0_i32 = arith.constant 0 : i32
    %c0_i32_0 = arith.constant 0 : i32
    return %arg1, %c0_i32 : i32, i32
  }
  func.func @transform_4(%arg0: i32, %arg1: i32) -> (i32, i32) {
    %c0_i32 = arith.constant 0 : i32
    %c0_i32_0 = arith.constant 0 : i32
    %c0_i32_1 = arith.constant 0 : i32
    return %c0_i32, %c0_i32_0 : i32, i32
  }
  func.func @transform_5(%arg0: i32, %arg1: i32) -> (i32, i32) {
    %c0_i32 = arith.constant 0 : i32
    %c0_i32_0 = arith.constant 0 : i32
    return %arg0, %c0_i32 : i32, i32
  }
}

</mosaic_0001>

<llo_original>
// kernel: feed_forward.1
$region0: #{feed_forward.1}
  #allocation0 [shape = 'u32[]', space=smem, size = 0x4, offset = 0x4, fixed_abs, tag = 'smem constant byte address 0x4 - core index']
  #allocation1 [shape = 'u32[144,128]{1,0:T(1,128)}', space=vmem, size = 0x12000, scoped, tag = 'internal scratch']
  #allocation2 [shape = 'f32[16,128]{1,0:T(8,128)}', space=vmem, size = 0x2000, scoped, tag = 'scratch operand']
  %s0 = inlined_call_operand.vmem [shape: f32[16,128], index: 0, kind: input, shape index: {}]
  %s1 = inlined_call_operand.vmem [shape: bf16[128,256], index: 1, kind: input, shape index: {}]
  %s2 = inlined_call_operand.vmem [shape: f32[1,256], index: 2, kind: input, shape index: {}]
  %s3 = inlined_call_operand.vmem [shape: bf16[256,128], index: 3, kind: input, shape index: {}]
  %s4 = inlined_call_operand.vmem [shape: f32[1,128], index: 4, kind: input, shape index: {}]
  %s5 = inlined_call_operand.hbm [shape: f32[16,128], index: 5, kind: output, shape index: {}]
  %s6 = sld [smem:[#allocation0]]
  $region38: #{feed_forward.1} parent=0
    _
  %s8 = ssub.s32 1, %s6
  %s9 = scalar_select 0, %s8, %s6
  $region1: #{feed_forward.1} parent=0
    #allocation3 [shape = 'u8[8192]{0}', space=vmem, size = 0x2000, scoped, tag = 'output window, operand 0, single buffered']
    #allocation4 [shape = 's32[1]{0}', space=sflag, size = 0x4, scoped, tag = 'scoped memory for feed_forward.1']
    %10 = vsyncpa [#allocation4], 0
    // Predicated region
    $region2: #{feed_forward.1} parent=1 // pred_check
      _
    $region3: #{feed_forward.1} parent=1 // pred_check_branch
      %12 = sbr.rel (0) target = $region5
    $region4: #{feed_forward.1} parent=1 // pred_region
      _
    $region5: #{feed_forward.1} parent=1 // pred_fallthru
      _
    // Predicated region
    $region6: #{feed_forward.1} parent=1 // pred_check
      _
    $region7: #{feed_forward.1} parent=1 // pred_check_branch
      %14 = sbr.rel (0) target = $region9
    $region8: #{feed_forward.1} parent=1 // pred_region
      _
    $region9: #{feed_forward.1} parent=1 // pred_fallthru
      _
    // Predicated region
    $region10: #{feed_forward.1} parent=1 // pred_check
      _
    $region11: #{feed_forward.1} parent=1 // pred_check_branch
      %16 = sbr.rel (0) target = $region13
    $region12: #{feed_forward.1} parent=1 // pred_region
      _
    $region13: #{feed_forward.1} parent=1 // pred_fallthru
      _
    // Predicated region
    $region14: #{feed_forward.1} parent=1 // pred_check
      _
    $region15: #{feed_forward.1} parent=1 // pred_check_branch
      %18 = sbr.rel (0) target = $region17
    $region16: #{feed_forward.1} parent=1 // pred_region
      _
    $region17: #{feed_forward.1} parent=1 // pred_fallthru
      _
    // Predicated region
    $region18: #{feed_forward.1} parent=1 // pred_check
      _
    $region19: #{feed_forward.1} parent=1 // pred_check_branch
      %20 = sbr.rel (0) target = $region21
    $region20: #{feed_forward.1} parent=1 // pred_region
      _
    $region21: #{feed_forward.1} parent=1 // pred_fallthru
      _
    %p22 = scmp.eq.s32.totalorder 0, 0
    // Predicated region
    $region22: #{feed_forward.1} parent=1 // pred_check
      %p23 = pneg %p22
    $region23: #{feed_forward.1} parent=1 // pred_check_branch
      %25 = sbr.rel (%p23) target = $region25
    $region24: #{feed_forward.1} parent=1 // pred_region
      %26 = vst [vmem:[#allocation2] sm:$0xff] 0.0
      %27 = vst [vmem:[#allocation2 + $0x8] sm:$0xff] 0.0
    $region25: #{feed_forward.1} parent=1 // pred_fallthru
      _
    %v28 = vld [vmem:[%s0] sm:$0xff]
    %v29 = vld [vmem:[%s0 + $0x8] sm:$0xff]
    %v30 = vpack.c.bf16 %v29, %v28
    %v31 = vld [vmem:[%s1] sm:$0xff]
    %v32 = vld [vmem:[%s1 + $0x8] sm:$0xff]
    %v33 = vld [vmem:[%s1 + $0x10] sm:$0xff]
    %v34 = vld [vmem:[%s1 + $0x18] sm:$0xff]
    %v35 = vld [vmem:[%s1 + $0x20] sm:$0xff]
    %v36 = vld [vmem:[%s1 + $0x28] sm:$0xff]
    %v37 = vld [vmem:[%s1 + $0x30] sm:$0xff]
    %v38 = vld [vmem:[%s1 + $0x38] sm:$0xff]
    %v39 = vld [vmem:[%s1 + $0x40] sm:$0xff]
    %v40 = vld [vmem:[%s1 + $0x48] sm:$0xff]
    %v41 = vld [vmem:[%s1 + $0x50] sm:$0xff]
    %v42 = vld [vmem:[%s1 + $0x58] sm:$0xff]
    %v43 = vld [vmem:[%s1 + $0x60] sm:$0xff]
    %v44 = vld [vmem:[%s1 + $0x68] sm:$0xff]
    %v45 = vld [vmem:[%s1 + $0x70] sm:$0xff]
    %v46 = vld [vmem:[%s1 + $0x78] sm:$0xff]
    %v47 = vld [vmem:[%s2] sm:$0x3]
    %v49 = vlaneseq
    %v50 = vshrl.u32 %v49, 7
    %v51 = vsub.s32 0, %v50
    %v52 = vrot.slane %v47, %v51
    %v53 = vlaneseq
    %v54 = vshrl.u32 %v53, 7
    %v55 = vsub.s32 1, %v54
    %v56 = vrot.slane %v47, %v55
    %v75 = vunpack.c.l.b16 %v31
    %v76 = vunpack.c.h.b16 %v31
    %v77 = vunpack.c.l.b16 %v32
    %v78 = vunpack.c.h.b16 %v32
    %v79 = vunpack.c.l.b16 %v33
    %v80 = vunpack.c.h.b16 %v33
    %v81 = vunpack.c.l.b16 %v34
    %v82 = vunpack.c.h.b16 %v34
    %v83 = vunpack.c.l.b16 %v35
    %v84 = vunpack.c.h.b16 %v35
    %v85 = vunpack.c.l.b16 %v36
    %v86 = vunpack.c.h.b16 %v36
    %v87 = vunpack.c.l.b16 %v37
    %v88 = vunpack.c.h.b16 %v37
    %v89 = vunpack.c.l.b16 %v38
    %v90 = vunpack.c.h.b16 %v38
    %v91 = vunpack.c.l.b16 %v39
    %v92 = vunpack.c.h.b16 %v39
    %v93 = vunpack.c.l.b16 %v40
    %v94 = vunpack.c.h.b16 %v40
    %v95 = vunpack.c.l.b16 %v41
    %v96 = vunpack.c.h.b16 %v41
    %v97 = vunpack.c.l.b16 %v42
    %v98 = vunpack.c.h.b16 %v42
    %v99 = vunpack.c.l.b16 %v43
    %v100 = vunpack.c.h.b16 %v43
    %v101 = vunpack.c.l.b16 %v44
    %v102 = vunpack.c.h.b16 %v44
    %v103 = vunpack.c.l.b16 %v45
    %v104 = vunpack.c.h.b16 %v45
    %v105 = vunpack.c.l.b16 %v46
    %v106 = vunpack.c.h.b16 %v46
    %v107 = vpack.c.b16 %v77, %v75
    %v108 = vpack.c.b16 %v78, %v76
    %v109 = vpack.c.b16 %v81, %v79
    %v110 = vpack.c.b16 %v82, %v80
    %v111 = vpack.c.b16 %v85, %v83
    %v112 = vpack.c.b16 %v86, %v84
    %v113 = vpack.c.b16 %v89, %v87
    %v114 = vpack.c.b16 %v90, %v88
    %v115 = vpack.c.b16 %v93, %v91
    %v116 = vpack.c.b16 %v94, %v92
    %v117 = vpack.c.b16 %v97, %v95
    %v118 = vpack.c.b16 %v98, %v96
    %v119 = vpack.c.b16 %v101, %v99
    %v120 = vpack.c.b16 %v102, %v100
    %v121 = vpack.c.b16 %v105, %v103
    %v122 = vpack.c.b16 %v106, %v104
    %139 = vmatprep.subr.bf16.mxu0 %v108
    %140 = vmatpush1.bf16.msra.mxu0 %v107
    %141 = vmatprep.subr.bf16.mxu0 %v110
    %142 = vmatpush1.bf16.msra.mxu0 %v109
    %143 = vmatprep.subr.bf16.mxu0 %v112
    %144 = vmatpush1.bf16.msra.mxu0 %v111
    %145 = vmatprep.subr.bf16.mxu0 %v114
    %146 = vmatpush1.bf16.msra.mxu0 %v113
    %147 = vmatprep.subr.bf16.mxu0 %v116
    %148 = vmatpush1.bf16.msra.mxu0 %v115
    %149 = vmatprep.subr.bf16.mxu0 %v118
    %150 = vmatpush1.bf16.msra.mxu0 %v117
    %151 = vmatprep.subr.bf16.mxu0 %v120
    %152 = vmatpush1.bf16.msra.mxu0 %v119
    %153 = vmatprep.subr.bf16.mxu0 %v122
    %154 = vmatpush1.bf16.msra.mxu0 %v121
    %155 = vmatprep.subr.bf16.mxu0 0
    %156 = vmatpush1.bf16.msra.mxu0 0
    %157 = vmatprep.subr.bf16.mxu0 0
    %158 = vmatpush1.bf16.msra.mxu0 0
    %159 = vmatprep.subr.bf16.mxu0 0
    %160 = vmatpush1.bf16.msra.mxu0 0
    %161 = vmatprep.subr.bf16.mxu0 0
    %162 = vmatpush1.bf16.msra.mxu0 0
    %163 = vmatprep.subr.bf16.mxu0 0
    %164 = vmatpush1.bf16.msra.mxu0 0
    %165 = vmatprep.subr.bf16.mxu0 0
    %166 = vmatpush1.bf16.msra.mxu0 0
    %167 = vmatprep.subr.bf16.mxu0 0
    %168 = vmatpush1.bf16.msra.mxu0 0
    %169 = vmatprep.subr.bf16.mxu0 0
    %170 = vmatpush1.bf16.msra.mxu0 0
    %171 = vmatprep.mubr.bf16.mxu0 0
    %172 = vmatmul.mubr.bf16.gmra.mrb[0].mxu0 %v30
    %v173 = vpop.f32.mrb[0].mxu0
    %v174 = vadd.f32 %v52, %v173
    %v175 = vpop.f32.mrb[0].mxu0
    %v176 = vadd.f32 %v56, %v175
    %v177 = vpop.f32.mrb[0].mxu0
    %v178 = vadd.f32 %v52, %v177
    %v179 = vpop.f32.mrb[0].mxu0
    %v180 = vadd.f32 %v56, %v179
    %181 = vdwg.mxu0
    %v182 = vmax.f32 %v174, 0.0
    %v183 = vmax.f32 %v176, 0.0
    %v184 = vmax.f32 %v178, 0.0
    %v185 = vmax.f32 %v180, 0.0
    %v186 = vld [vmem:[#allocation2] sm:$0xff]
    %v187 = vld [vmem:[#allocation2 + $0x8] sm:$0xff]
    %v188 = vpack.c.bf16 %v184, %v182
    %v189 = vpack.c.bf16 %v185, %v183
    %v190 = vld [vmem:[%s3] sm:$0xf]
    %v191 = vld [vmem:[%s3 + $0x4] sm:$0xf]
    %v192 = vld [vmem:[%s3 + $0x8] sm:$0xf]
    %v193 = vld [vmem:[%s3 + $0xc] sm:$0xf]
    %v194 = vld [vmem:[%s3 + $0x10] sm:$0xf]
    %v195 = vld [vmem:[%s3 + $0x14] sm:$0xf]
    %v196 = vld [vmem:[%s3 + $0x18] sm:$0xf]
    %v197 = vld [vmem:[%s3 + $0x1c] sm:$0xf]
    %v198 = vld [vmem:[%s3 + $0x20] sm:$0xf]
    %v199 = vld [vmem:[%s3 + $0x24] sm:$0xf]
    %v200 = vld [vmem:[%s3 + $0x28] sm:$0xf]
    %v201 = vld [vmem:[%s3 + $0x2c] sm:$0xf]
    %v202 = vld [vmem:[%s3 + $0x30] sm:$0xf]
    %v203 = vld [vmem:[%s3 + $0x34] sm:$0xf]
    %v204 = vld [vmem:[%s3 + $0x38] sm:$0xf]
    %v205 = vld [vmem:[%s3 + $0x3c] sm:$0xf]
    %v206 = vld [vmem:[%s3 + $0x40] sm:$0xf]
    %v207 = vld [vmem:[%s3 + $0x44] sm:$0xf]
    %v208 = vld [vmem:[%s3 + $0x48] sm:$0xf]
    %v209 = vld [vmem:[%s3 + $0x4c] sm:$0xf]
    %v210 = vld [vmem:[%s3 + $0x50] sm:$0xf]
    %v211 = vld [vmem:[%s3 + $0x54] sm:$0xf]
    %v212 = vld [vmem:[%s3 + $0x58] sm:$0xf]
    %v213 = vld [vmem:[%s3 + $0x5c] sm:$0xf]
    %v214 = vld [vmem:[%s3 + $0x60] sm:$0xf]
    %v215 = vld [vmem:[%s3 + $0x64] sm:$0xf]
    %v216 = vld [vmem:[%s3 + $0x68] sm:$0xf]
    %v217 = vld [vmem:[%s3 + $0x6c] sm:$0xf]
    %v218 = vld [vmem:[%s3 + $0x70] sm:$0xf]
    %v219 = vld [vmem:[%s3 + $0x74] sm:$0xf]
    %v220 = vld [vmem:[%s3 + $0x78] sm:$0xf]
    %v221 = vld [vmem:[%s3 + $0x7c] sm:$0xf]
    %v254 = vunpack.c.l.b16 %v190
    %v255 = vunpack.c.l.b16 %v191
    %v256 = vunpack.c.l.b16 %v192
    %v257 = vunpack.c.l.b16 %v193
    %v258 = vunpack.c.l.b16 %v194
    %v259 = vunpack.c.l.b16 %v195
    %v260 = vunpack.c.l.b16 %v196
    %v261 = vunpack.c.l.b16 %v197
    %v262 = vunpack.c.l.b16 %v198
    %v263 = vunpack.c.l.b16 %v199
    %v264 = vunpack.c.l.b16 %v200
    %v265 = vunpack.c.l.b16 %v201
    %v266 = vunpack.c.l.b16 %v202
    %v267 = vunpack.c.l.b16 %v203
    %v268 = vunpack.c.l.b16 %v204
    %v269 = vunpack.c.l.b16 %v205
    %v270 = vunpack.c.l.b16 %v206
    %v271 = vunpack.c.l.b16 %v207
    %v272 = vunpack.c.l.b16 %v208
    %v273 = vunpack.c.l.b16 %v209
    %v274 = vunpack.c.l.b16 %v210
    %v275 = vunpack.c.l.b16 %v211
    %v276 = vunpack.c.l.b16 %v212
    %v277 = vunpack.c.l.b16 %v213
    %v278 = vunpack.c.l.b16 %v214
    %v279 = vunpack.c.l.b16 %v215
    %v280 = vunpack.c.l.b16 %v216
    %v281 = vunpack.c.l.b16 %v217
    %v282 = vunpack.c.l.b16 %v218
    %v283 = vunpack.c.l.b16 %v219
    %v284 = vunpack.c.l.b16 %v220
    %v285 = vunpack.c.l.b16 %v221
    %v286 = vpack.c.b16 %v255, %v254
    %v287 = vpack.c.b16 %v257, %v256
    %v288 = vpack.c.b16 %v259, %v258
    %v289 = vpack.c.b16 %v261, %v260
    %v290 = vpack.c.b16 %v263, %v262
    %v291 = vpack.c.b16 %v265, %v264
    %v292 = vpack.c.b16 %v267, %v266
    %v293 = vpack.c.b16 %v269, %v268
    %v294 = vpack.c.b16 %v271, %v270
    %v295 = vpack.c.b16 %v273, %v272
    %v296 = vpack.c.b16 %v275, %v274
    %v297 = vpack.c.b16 %v277, %v276
    %v298 = vpack.c.b16 %v279, %v278
    %v299 = vpack.c.b16 %v281, %v280
    %v300 = vpack.c.b16 %v283, %v282
    %v301 = vpack.c.b16 %v285, %v284
    %318 = vmatprep.subr.bf16.mxu0 0
    %319 = vmatpush1.bf16.msra.mxu0 %v286
    %320 = vmatprep.subr.bf16.mxu0 0
    %321 = vmatpush1.bf16.msra.mxu0 %v287
    %322 = vmatprep.subr.bf16.mxu0 0
    %323 = vmatpush1.bf16.msra.mxu0 %v288
    %324 = vmatprep.subr.bf16.mxu0 0
    %325 = vmatpush1.bf16.msra.mxu0 %v289
    %326 = vmatprep.subr.bf16.mxu0 0
    %327 = vmatpush1.bf16.msra.mxu0 %v290
    %328 = vmatprep.subr.bf16.mxu0 0
    %329 = vmatpush1.bf16.msra.mxu0 %v291
    %330 = vmatprep.subr.bf16.mxu0 0
    %331 = vmatpush1.bf16.msra.mxu0 %v292
    %332 = vmatprep.subr.bf16.mxu0 0
    %333 = vmatpush1.bf16.msra.mxu0 %v293
    %334 = vmatprep.subr.bf16.mxu0 0
    %335 = vmatpush1.bf16.msra.mxu0 %v294
    %336 = vmatprep.subr.bf16.mxu0 0
    %337 = vmatpush1.bf16.msra.mxu0 %v295
    %338 = vmatprep.subr.bf16.mxu0 0
    %339 = vmatpush1.bf16.msra.mxu0 %v296
    %340 = vmatprep.subr.bf16.mxu0 0
    %341 = vmatpush1.bf16.msra.mxu0 %v297
    %342 = vmatprep.subr.bf16.mxu0 0
    %343 = vmatpush1.bf16.msra.mxu0 %v298
    %344 = vmatprep.subr.bf16.mxu0 0
    %345 = vmatpush1.bf16.msra.mxu0 %v299
    %346 = vmatprep.subr.bf16.mxu0 0
    %347 = vmatpush1.bf16.msra.mxu0 %v300
    %348 = vmatprep.subr.bf16.mxu0 0
    %349 = vmatpush1.bf16.msra.mxu0 %v301
    %350 = vmatprep.mubr.bf16.mxu0 %v189
    %351 = vmatmul.mubr.bf16.gmra.mrb[0].mxu0 %v188
    %v352 = vpop.f32.mrb[0].mxu0
    %v353 = vadd.f32 0.0, %v352
    %v354 = vpop.f32.mrb[0].mxu0
    %v355 = vpop.f32.mrb[0].mxu0
    %v356 = vadd.f32 0.0, %v355
    %v357 = vpop.f32.mrb[0].mxu0
    %358 = vdwg.mxu0
    %v359 = vadd.f32 %v186, %v353
    %v360 = vadd.f32 %v187, %v356
    %361 = vst [vmem:[#allocation2] sm:$0xff] %v359
    %362 = vst [vmem:[#allocation2 + $0x8] sm:$0xff] %v360
    // Predicated region
    $region26: #{feed_forward.1} parent=1 // pred_check
      %p363 = pneg %p22
    $region27: #{feed_forward.1} parent=1 // pred_check_branch
      %365 = sbr.rel (%p363) target = $region29
    $region28: #{feed_forward.1} parent=1 // pred_region
      %v366 = vld [vmem:[#allocation2] sm:$0xff]
      %v367 = vld [vmem:[#allocation2 + $0x8] sm:$0xff]
      %v368 = vld [vmem:[%s4] sm:$0x1]
      %v370 = vlaneseq
      %v371 = vshrl.u32 %v370, 7
      %v372 = vsub.s32 0, %v371
      %v373 = vrot.slane %v368, %v372
      %v375 = vadd.f32 %v366, %v373
      %v376 = vadd.f32 %v367, %v373
      %377 = vst [vmem:[#allocation3] sm:$0xff] %v375
      %378 = vst [vmem:[#allocation3 + $0x8] sm:$0xff] %v376
    $region29: #{feed_forward.1} parent=1 // pred_fallthru
      _
    // Predicated region
    $region30: #{feed_forward.1} parent=1 // pred_check
      _
    $region31: #{feed_forward.1} parent=1 // pred_check_branch
      %380 = sbr.rel (0) target = $region33
    $region32: #{feed_forward.1} parent=1 // pred_region
      %s382 = ssub.s32 256, 256
      %383 = vsyncadd [#allocation4], %s382
      %s384 = sshll.u32 [#allocation3], 4
      %s385 = int_to_ptr.vmem [resolvable:$true] %s384
      %390 = dma.vmem_to_hbm [thread:$0]  %s385, 256, %s5, [#allocation4], 128, 128, 8
    $region33: #{feed_forward.1} parent=1 // pred_fallthru
      _
    // Predicated region
    $region34: #{feed_forward.1} parent=1 // pred_check
      _
    $region35: #{feed_forward.1} parent=1 // pred_check_branch
      %392 = sbr.rel (0) target = $region37
    $region36: #{feed_forward.1} parent=1 // pred_region
      %393 = dma.done [#allocation4], 256
    $region37: #{feed_forward.1} parent=1 // pred_fallthru
      _
    %394 = vsyncpa [#allocation4], 1

// kernel: feed_forward.1
$region0: #{feed_forward.1}
  #allocation0 [shape = 'u32[]', space=smem, size = 0x4, offset = 0x4, fixed_abs, tag = 'smem constant byte address 0x4 - core index']
  #allocation1 [shape = 'u32[144,128]{1,0:T(1,128)}', space=vmem, size = 0x12000, scoped, tag = 'internal scratch']
  #allocation2 [shape = 'f32[16,128]{1,0:T(8,128)}', space=vmem, size = 0x2000, scoped, tag = 'scratch operand']
  %s0 = inlined_call_operand.vmem [shape: f32[16,128], index: 0, kind: input, shape index: {}]
  %s1 = inlined_call_operand.vmem [shape: bf16[128,256], index: 1, kind: input, shape index: {}]
  %s2 = inlined_call_operand.vmem [shape: f32[1,256], index: 2, kind: input, shape index: {}]
  %s3 = inlined_call_operand.vmem [shape: bf16[256,128], index: 3, kind: input, shape index: {}]
  %s4 = inlined_call_operand.vmem [shape: f32[1,128], index: 4, kind: input, shape index: {}]
  %s5 = inlined_call_operand.hbm [shape: f32[16,128], index: 5, kind: output, shape index: {}]
  %s6 = sld [smem:[#allocation0]]
  $region38: #{feed_forward.1} parent=0
    _
  %s8 = ssub.s32 1, %s6
  %s9 = scalar_select 0, %s8, %s6
  $region1: #{feed_forward.1} parent=0
    #allocation3 [shape = 'u8[8192]{0}', space=vmem, size = 0x2000, scoped, tag = 'output window, operand 0, single buffered']
    #allocation4 [shape = 's32[1]{0}', space=sflag, size = 0x4, scoped, tag = 'scoped memory for feed_forward.1']
    %10 = vsyncpa [#allocation4], 0
    // Predicated region
    $region2: #{feed_forward.1} parent=1 // pred_check
      _
    $region3: #{feed_forward.1} parent=1 // pred_check_branch
      %12 = sbr.rel (0) target = $region5
    $region4: #{feed_forward.1} parent=1 // pred_region
      _
    $region5: #{feed_forward.1} parent=1 // pred_fallthru
      _
    // Predicated region
    $region6: #{feed_forward.1} parent=1 // pred_check
      _
    $region7: #{feed_forward.1} parent=1 // pred_check_branch
      %14 = sbr.rel (0) target = $region9
    $region8: #{feed_forward.1} parent=1 // pred_region
      _
    $region9: #{feed_forward.1} parent=1 // pred_fallthru
      _
    // Predicated region
    $region10: #{feed_forward.1} parent=1 // pred_check
      _
    $region11: #{feed_forward.1} parent=1 // pred_check_branch
      %16 = sbr.rel (0) target = $region13
    $region12: #{feed_forward.1} parent=1 // pred_region
      _
    $region13: #{feed_forward.1} parent=1 // pred_fallthru
      _
    // Predicated region
    $region14: #{feed_forward.1} parent=1 // pred_check
      _
    $region15: #{feed_forward.1} parent=1 // pred_check_branch
      %18 = sbr.rel (0) target = $region17
    $region16: #{feed_forward.1} parent=1 // pred_region
      _
    $region17: #{feed_forward.1} parent=1 // pred_fallthru
      _
    // Predicated region
    $region18: #{feed_forward.1} parent=1 // pred_check
      _
    $region19: #{feed_forward.1} parent=1 // pred_check_branch
      %20 = sbr.rel (0) target = $region21
    $region20: #{feed_forward.1} parent=1 // pred_region
      _
    $region21: #{feed_forward.1} parent=1 // pred_fallthru
      _
    %p22 = scmp.eq.s32.totalorder 0, 0
    // Predicated region
    $region22: #{feed_forward.1} parent=1 // pred_check
      %p23 = pneg %p22
    $region23: #{feed_forward.1} parent=1 // pred_check_branch
      %25 = sbr.rel (%p23) target = $region25
    $region24: #{feed_forward.1} parent=1 // pred_region
      %26 = vst [vmem:[#allocation2] sm:$0xff] 0.0
      %27 = vst [vmem:[#allocation2 + $0x8] sm:$0xff] 0.0
    $region25: #{feed_forward.1} parent=1 // pred_fallthru
      _
    %v28 = vld [vmem:[%s0] sm:$0xff]
    %v29 = vld [vmem:[%s0 + $0x8] sm:$0xff]
    %v30 = vpack.c.bf16 %v29, %v28
    %v31 = vld [vmem:[%s1] sm:$0xff]
    %v32 = vld [vmem:[%s1 + $0x8] sm:$0xff]
    %v33 = vld [vmem:[%s1 + $0x10] sm:$0xff]
    %v34 = vld [vmem:[%s1 + $0x18] sm:$0xff]
    %v35 = vld [vmem:[%s1 + $0x20] sm:$0xff]
    %v36 = vld [vmem:[%s1 + $0x28] sm:$0xff]
    %v37 = vld [vmem:[%s1 + $0x30] sm:$0xff]
    %v38 = vld [vmem:[%s1 + $0x38] sm:$0xff]
    %v39 = vld [vmem:[%s1 + $0x40] sm:$0xff]
    %v40 = vld [vmem:[%s1 + $0x48] sm:$0xff]
    %v41 = vld [vmem:[%s1 + $0x50] sm:$0xff]
    %v42 = vld [vmem:[%s1 + $0x58] sm:$0xff]
    %v43 = vld [vmem:[%s1 + $0x60] sm:$0xff]
    %v44 = vld [vmem:[%s1 + $0x68] sm:$0xff]
    %v45 = vld [vmem:[%s1 + $0x70] sm:$0xff]
    %v46 = vld [vmem:[%s1 + $0x78] sm:$0xff]
    %v47 = vld [vmem:[%s2] sm:$0x3]
    %v49 = vlaneseq
    %v50 = vshrl.u32 %v49, 7
    %v51 = vsub.s32 0, %v50
    %v52 = vrot.slane %v47, %v51
    %v53 = vlaneseq
    %v54 = vshrl.u32 %v53, 7
    %v55 = vsub.s32 1, %v54
    %v56 = vrot.slane %v47, %v55
    %v75 = vunpack.c.l.b16 %v31
    %v76 = vunpack.c.h.b16 %v31
    %v77 = vunpack.c.l.b16 %v32
    %v78 = vunpack.c.h.b16 %v32
    %v79 = vunpack.c.l.b16 %v33
    %v80 = vunpack.c.h.b16 %v33
    %v81 = vunpack.c.l.b16 %v34
    %v82 = vunpack.c.h.b16 %v34
    %v83 = vunpack.c.l.b16 %v35
    %v84 = vunpack.c.h.b16 %v35
    %v85 = vunpack.c.l.b16 %v36
    %v86 = vunpack.c.h.b16 %v36
    %v87 = vunpack.c.l.b16 %v37
    %v88 = vunpack.c.h.b16 %v37
    %v89 = vunpack.c.l.b16 %v38
    %v90 = vunpack.c.h.b16 %v38
    %v91 = vunpack.c.l.b16 %v39
    %v92 = vunpack.c.h.b16 %v39
    %v93 = vunpack.c.l.b16 %v40
    %v94 = vunpack.c.h.b16 %v40
    %v95 = vunpack.c.l.b16 %v41
    %v96 = vunpack.c.h.b16 %v41
    %v97 = vunpack.c.l.b16 %v42
    %v98 = vunpack.c.h.b16 %v42
    %v99 = vunpack.c.l.b16 %v43
    %v100 = vunpack.c.h.b16 %v43
    %v101 = vunpack.c.l.b16 %v44
    %v102 = vunpack.c.h.b16 %v44
    %v103 = vunpack.c.l.b16 %v45
    %v104 = vunpack.c.h.b16 %v45
    %v105 = vunpack.c.l.b16 %v46
    %v106 = vunpack.c.h.b16 %v46
    %v107 = vpack.c.b16 %v77, %v75
    %v108 = vpack.c.b16 %v78, %v76
    %v109 = vpack.c.b16 %v81, %v79
    %v110 = vpack.c.b16 %v82, %v80
    %v111 = vpack.c.b16 %v85, %v83
    %v112 = vpack.c.b16 %v86, %v84
    %v113 = vpack.c.b16 %v89, %v87
    %v114 = vpack.c.b16 %v90, %v88
    %v115 = vpack.c.b16 %v93, %v91
    %v116 = vpack.c.b16 %v94, %v92
    %v117 = vpack.c.b16 %v97, %v95
    %v118 = vpack.c.b16 %v98, %v96
    %v119 = vpack.c.b16 %v101, %v99
    %v120 = vpack.c.b16 %v102, %v100
    %v121 = vpack.c.b16 %v105, %v103
    %v122 = vpack.c.b16 %v106, %v104
    %139 = vmatprep.subr.bf16.mxu0 %v108
    %140 = vmatpush1.bf16.msra.mxu0 %v107
    %141 = vmatprep.subr.bf16.mxu0 %v110
    %142 = vmatpush1.bf16.msra.mxu0 %v109
    %143 = vmatprep.subr.bf16.mxu0 %v112
    %144 = vmatpush1.bf16.msra.mxu0 %v111
    %145 = vmatprep.subr.bf16.mxu0 %v114
    %146 = vmatpush1.bf16.msra.mxu0 %v113
    %147 = vmatprep.subr.bf16.mxu0 %v116
    %148 = vmatpush1.bf16.msra.mxu0 %v115
    %149 = vmatprep.subr.bf16.mxu0 %v118
    %150 = vmatpush1.bf16.msra.mxu0 %v117
    %151 = vmatprep.subr.bf16.mxu0 %v120
    %152 = vmatpush1.bf16.msra.mxu0 %v119
    %153 = vmatprep.subr.bf16.mxu0 %v122
    %154 = vmatpush1.bf16.msra.mxu0 %v121
    %155 = vmatprep.subr.bf16.mxu0 0
    %156 = vmatpush1.bf16.msra.mxu0 0
    %157 = vmatprep.subr.bf16.mxu0 0
    %158 = vmatpush1.bf16.msra.mxu0 0
    %159 = vmatprep.subr.bf16.mxu0 0
    %160 = vmatpush1.bf16.msra.mxu0 0
    %161 = vmatprep.subr.bf16.mxu0 0
    %162 = vmatpush1.bf16.msra.mxu0 0
    %163 = vmatprep.subr.bf16.mxu0 0
    %164 = vmatpush1.bf16.msra.mxu0 0
    %165 = vmatprep.subr.bf16.mxu0 0
    %166 = vmatpush1.bf16.msra.mxu0 0
    %167 = vmatprep.subr.bf16.mxu0 0
    %168 = vmatpush1.bf16.msra.mxu0 0
    %169 = vmatprep.subr.bf16.mxu0 0
    %170 = vmatpush1.bf16.msra.mxu0 0
    %171 = vmatprep.mubr.bf16.mxu0 0
    %172 = vmatmul.mubr.bf16.gmra.mrb[0].mxu0 %v30
    %v173 = vpop.f32.mrb[0].mxu0
    %v174 = vadd.f32 %v52, %v173
    %v175 = vpop.f32.mrb[0].mxu0
    %v176 = vadd.f32 %v56, %v175
    %v177 = vpop.f32.mrb[0].mxu0
    %v178 = vadd.f32 %v52, %v177
    %v179 = vpop.f32.mrb[0].mxu0
    %v180 = vadd.f32 %v56, %v179
    %181 = vdwg.mxu0
    %v182 = vmax.f32 %v174, 0.0
    %v183 = vmax.f32 %v176, 0.0
    %v184 = vmax.f32 %v178, 0.0
    %v185 = vmax.f32 %v180, 0.0
    %v186 = vld [vmem:[#allocation2] sm:$0xff]
    %v187 = vld [vmem:[#allocation2 + $0x8] sm:$0xff]
    %v188 = vpack.c.bf16 %v184, %v182
    %v189 = vpack.c.bf16 %v185, %v183
    %v190 = vld [vmem:[%s3] sm:$0xf]
    %v191 = vld [vmem:[%s3 + $0x4] sm:$0xf]
    %v192 = vld [vmem:[%s3 + $0x8] sm:$0xf]
    %v193 = vld [vmem:[%s3 + $0xc] sm:$0xf]
    %v194 = vld [vmem:[%s3 + $0x10] sm:$0xf]
    %v195 = vld [vmem:[%s3 + $0x14] sm:$0xf]
    %v196 = vld [vmem:[%s3 + $0x18] sm:$0xf]
    %v197 = vld [vmem:[%s3 + $0x1c] sm:$0xf]
    %v198 = vld [vmem:[%s3 + $0x20] sm:$0xf]
    %v199 = vld [vmem:[%s3 + $0x24] sm:$0xf]
    %v200 = vld [vmem:[%s3 + $0x28] sm:$0xf]
    %v201 = vld [vmem:[%s3 + $0x2c] sm:$0xf]
    %v202 = vld [vmem:[%s3 + $0x30] sm:$0xf]
    %v203 = vld [vmem:[%s3 + $0x34] sm:$0xf]
    %v204 = vld [vmem:[%s3 + $0x38] sm:$0xf]
    %v205 = vld [vmem:[%s3 + $0x3c] sm:$0xf]
    %v206 = vld [vmem:[%s3 + $0x40] sm:$0xf]
    %v207 = vld [vmem:[%s3 + $0x44] sm:$0xf]
    %v208 = vld [vmem:[%s3 + $0x48] sm:$0xf]
    %v209 = vld [vmem:[%s3 + $0x4c] sm:$0xf]
    %v210 = vld [vmem:[%s3 + $0x50] sm:$0xf]
    %v211 = vld [vmem:[%s3 + $0x54] sm:$0xf]
    %v212 = vld [vmem:[%s3 + $0x58] sm:$0xf]
    %v213 = vld [vmem:[%s3 + $0x5c] sm:$0xf]
    %v214 = vld [vmem:[%s3 + $0x60] sm:$0xf]
    %v215 = vld [vmem:[%s3 + $0x64] sm:$0xf]
    %v216 = vld [vmem:[%s3 + $0x68] sm:$0xf]
    %v217 = vld [vmem:[%s3 + $0x6c] sm:$0xf]
    %v218 = vld [vmem:[%s3 + $0x70] sm:$0xf]
    %v219 = vld [vmem:[%s3 + $0x74] sm:$0xf]
    %v220 = vld [vmem:[%s3 + $0x78] sm:$0xf]
    %v221 = vld [vmem:[%s3 + $0x7c] sm:$0xf]
    %v254 = vunpack.c.l.b16 %v190
    %v255 = vunpack.c.l.b16 %v191
    %v256 = vunpack.c.l.b16 %v192
    %v257 = vunpack.c.l.b16 %v193
    %v258 = vunpack.c.l.b16 %v194
    %v259 = vunpack.c.l.b16 %v195
    %v260 = vunpack.c.l.b16 %v196
    %v261 = vunpack.c.l.b16 %v197
    %v262 = vunpack.c.l.b16 %v198
    %v263 = vunpack.c.l.b16 %v199
    %v264 = vunpack.c.l.b16 %v200
    %v265 = vunpack.c.l.b16 %v201
    %v266 = vunpack.c.l.b16 %v202
    %v267 = vunpack.c.l.b16 %v203
    %v268 = vunpack.c.l.b16 %v204
    %v269 = vunpack.c.l.b16 %v205
    %v270 = vunpack.c.l.b16 %v206
    %v271 = vunpack.c.l.b16 %v207
    %v272 = vunpack.c.l.b16 %v208
    %v273 = vunpack.c.l.b16 %v209
    %v274 = vunpack.c.l.b16 %v210
    %v275 = vunpack.c.l.b16 %v211
    %v276 = vunpack.c.l.b16 %v212
    %v277 = vunpack.c.l.b16 %v213
    %v278 = vunpack.c.l.b16 %v214
    %v279 = vunpack.c.l.b16 %v215
    %v280 = vunpack.c.l.b16 %v216
    %v281 = vunpack.c.l.b16 %v217
    %v282 = vunpack.c.l.b16 %v218
    %v283 = vunpack.c.l.b16 %v219
    %v284 = vunpack.c.l.b16 %v220
    %v285 = vunpack.c.l.b16 %v221
    %v286 = vpack.c.b16 %v255, %v254
    %v287 = vpack.c.b16 %v257, %v256
    %v288 = vpack.c.b16 %v259, %v258
    %v289 = vpack.c.b16 %v261, %v260
    %v290 = vpack.c.b16 %v263, %v262
    %v291 = vpack.c.b16 %v265, %v264
    %v292 = vpack.c.b16 %v267, %v266
    %v293 = vpack.c.b16 %v269, %v268
    %v294 = vpack.c.b16 %v271, %v270
    %v295 = vpack.c.b16 %v273, %v272
    %v296 = vpack.c.b16 %v275, %v274
    %v297 = vpack.c.b16 %v277, %v276
    %v298 = vpack.c.b16 %v279, %v278
    %v299 = vpack.c.b16 %v281, %v280
    %v300 = vpack.c.b16 %v283, %v282
    %v301 = vpack.c.b16 %v285, %v284
    %318 = vmatprep.subr.bf16.mxu0 0
    %319 = vmatpush1.bf16.msra.mxu0 %v286
    %320 = vmatprep.subr.bf16.mxu0 0
    %321 = vmatpush1.bf16.msra.mxu0 %v287
    %322 = vmatprep.subr.bf16.mxu0 0
    %323 = vmatpush1.bf16.msra.mxu0 %v288
    %324 = vmatprep.subr.bf16.mxu0 0
    %325 = vmatpush1.bf16.msra.mxu0 %v289
    %326 = vmatprep.subr.bf16.mxu0 0
    %327 = vmatpush1.bf16.msra.mxu0 %v290
    %328 = vmatprep.subr.bf16.mxu0 0
    %329 = vmatpush1.bf16.msra.mxu0 %v291
    %330 = vmatprep.subr.bf16.mxu0 0
    %331 = vmatpush1.bf16.msra.mxu0 %v292
    %332 = vmatprep.subr.bf16.mxu0 0
    %333 = vmatpush1.bf16.msra.mxu0 %v293
    %334 = vmatprep.subr.bf16.mxu0 0
    %335 = vmatpush1.bf16.msra.mxu0 %v294
    %336 = vmatprep.subr.bf16.mxu0 0
    %337 = vmatpush1.bf16.msra.mxu0 %v295
    %338 = vmatprep.subr.bf16.mxu0 0
    %339 = vmatpush1.bf16.msra.mxu0 %v296
    %340 = vmatprep.subr.bf16.mxu0 0
    %341 = vmatpush1.bf16.msra.mxu0 %v297
    %342 = vmatprep.subr.bf16.mxu0 0
    %343 = vmatpush1.bf16.msra.mxu0 %v298
    %344 = vmatprep.subr.bf16.mxu0 0
    %345 = vmatpush1.bf16.msra.mxu0 %v299
    %346 = vmatprep.subr.bf16.mxu0 0
    %347 = vmatpush1.bf16.msra.mxu0 %v300
    %348 = vmatprep.subr.bf16.mxu0 0
    %349 = vmatpush1.bf16.msra.mxu0 %v301
    %350 = vmatprep.mubr.bf16.mxu0 %v189
    %351 = vmatmul.mubr.bf16.gmra.mrb[0].mxu0 %v188
    %v352 = vpop.f32.mrb[0].mxu0
    %v353 = vadd.f32 0.0, %v352
    %v354 = vpop.f32.mrb[0].mxu0
    %v355 = vpop.f32.mrb[0].mxu0
    %v356 = vadd.f32 0.0, %v355
    %v357 = vpop.f32.mrb[0].mxu0
    %358 = vdwg.mxu0
    %v359 = vadd.f32 %v186, %v353
    %v360 = vadd.f32 %v187, %v356
    %361 = vst [vmem:[#allocation2] sm:$0xff] %v359
    %362 = vst [vmem:[#allocation2 + $0x8] sm:$0xff] %v360
    // Predicated region
    $region26: #{feed_forward.1} parent=1 // pred_check
      %p363 = pneg %p22
    $region27: #{feed_forward.1} parent=1 // pred_check_branch
      %365 = sbr.rel (%p363) target = $region29
    $region28: #{feed_forward.1} parent=1 // pred_region
      %v366 = vld [vmem:[#allocation2] sm:$0xff]
      %v367 = vld [vmem:[#allocation2 + $0x8] sm:$0xff]
      %v368 = vld [vmem:[%s4] sm:$0x1]
      %v370 = vlaneseq
      %v371 = vshrl.u32 %v370, 7
      %v372 = vsub.s32 0, %v371
      %v373 = vrot.slane %v368, %v372
      %v375 = vadd.f32 %v366, %v373
      %v376 = vadd.f32 %v367, %v373
      %377 = vst [vmem:[#allocation3] sm:$0xff] %v375
      %378 = vst [vmem:[#allocation3 + $0x8] sm:$0xff] %v376
    $region29: #{feed_forward.1} parent=1 // pred_fallthru
      _
    // Predicated region
    $region30: #{feed_forward.1} parent=1 // pred_check
      _
    $region31: #{feed_forward.1} parent=1 // pred_check_branch
      %380 = sbr.rel (0) target = $region33
    $region32: #{feed_forward.1} parent=1 // pred_region
      %s382 = ssub.s32 256, 256
      %383 = vsyncadd [#allocation4], %s382
      %s384 = sshll.u32 [#allocation3], 4
      %s385 = int_to_ptr.vmem [resolvable:$true] %s384
      %390 = dma.vmem_to_hbm [thread:$0]  %s385, 256, %s5, [#allocation4], 128, 128, 8
    $region33: #{feed_forward.1} parent=1 // pred_fallthru
      _
    // Predicated region
    $region34: #{feed_forward.1} parent=1 // pred_check
      _
    $region35: #{feed_forward.1} parent=1 // pred_check_branch
      %392 = sbr.rel (0) target = $region37
    $region36: #{feed_forward.1} parent=1 // pred_region
      %393 = dma.done [#allocation4], 256
    $region37: #{feed_forward.1} parent=1 // pred_fallthru
      _
    %394 = vsyncpa [#allocation4], 1

</llo_original>
